<compile_context>
chip_gen: v7x
topology: tpu7x:2x2x1
jax: 0.10.0
libtpu: 0.0.40
codegen_flags: <defaults>
</compile_context>

<pallas_src>
import functools

import jax
import jax.numpy as jnp
import numpy as np
from jax import lax
from jax.experimental import pallas as pl
from jax.experimental.pallas import tpu as pltpu


# ----------------------------------------------------------------------------
# Parameter / buffer construction (mirrors PositionalEncoding.__init__)
# ----------------------------------------------------------------------------
def make_pe_buffer(d_model: int, max_len: int) -> jnp.ndarray:
    """Builds the (max_len, d_model) sinusoidal positional-encoding buffer."""
    position = np.arange(0, max_len, dtype=np.float32)[:, None]          # (max_len, 1)
    div_term = np.exp(
        np.arange(0, d_model, 2, dtype=np.float32) * (-np.log(10000.0) / d_model)
    )                                                                     # (d_model/2,)
    pe = np.zeros((max_len, d_model), dtype=np.float32)
    pe[:, 0::2] = np.sin(position * div_term)
    pe[:, 1::2] = np.cos(position * div_term)
    return jnp.asarray(pe)


# ----------------------------------------------------------------------------
# Pallas kernel: out = dropout(x + pe, p) with inverted-dropout scaling.
# Grid = (num_seq_tiles, batch); kernel refs are (TILE_S, D).
# ----------------------------------------------------------------------------
def _pos_enc_kernel(seed_ref, x_ref, pe_ref, o_ref, *,
                    p: float, training: bool, seq_len: int, tile_s: int, d: int):
    # x_ref / o_ref: (tile_s, d) (batch dim squeezed);  pe_ref: (tile_s, d)
    y = x_ref[...] + pe_ref[...]

    if training and p > 0.0:
        if p >= 1.0:
            y = jnp.zeros_like(y)
        else:
            s_idx = pl.program_id(0)
            b_idx = pl.program_id(1)

            # Global element id (unique per element of the full (B, S, D) array,
            # independent of the tiling) -> deterministic per-element stream.
            rows = lax.broadcasted_iota(jnp.int32, (tile_s, d), 0).astype(jnp.uint32)
            cols = lax.broadcasted_iota(jnp.int32, (tile_s, d), 1).astype(jnp.uint32)
            row0 = (s_idx * tile_s).astype(jnp.uint32)
            b_u = b_idx.astype(jnp.uint32)
            gid = (b_u * jnp.uint32(seq_len) + row0 + rows) * jnp.uint32(d) + cols

            # Mix in the seed, then murmur3 fmix32 finalizer -> uniform u32 bits.
            seed_u = seed_ref[0].astype(jnp.uint32)
            h = gid ^ (seed_u * jnp.uint32(0x9E3779B9))
            h = h ^ (h >> 16)
            h = h * jnp.uint32(0x85EBCA6B)
            h = h ^ (h >> 13)
            h = h * jnp.uint32(0xC2B2AE35)
            h = h ^ (h >> 16)

            threshold = jnp.uint32(min(int(round(p * float(2 ** 32))), 2 ** 32 - 1))
            keep = h >= threshold                       # drop prob ~= p
            scale = jnp.float32(1.0 / (1.0 - p))
            y = jnp.where(keep, y * scale, jnp.zeros_like(y))

    o_ref[...] = y.astype(o_ref.dtype)


def positional_encoding_forward(
    x: jnp.ndarray,
    pe: jnp.ndarray,
    *,
    p: float = 0.1,
    training: bool = False,
    seed: int = 0,
    tile_s_target: int = 512,
) -> jnp.ndarray:
    """x: (B, S, D); pe: (max_len, D). Returns dropout(x + pe[:S], p)."""
    B, S, D = x.shape
    pe_slice = pe[:S, :]                               # (S, D) -- host-side indexing glue
    seed_arr = jnp.array([seed], dtype=jnp.int32)

    # Seq tile: either the whole sequence (always a legal block) or a large
    # sublane-dense tile (multiple of 8 rows) that keeps VMEM use modest
    # (<= ~2 MiB per buffer at D=512 f32) while amortizing per-step overhead.
    tile_s = S if S <= tile_s_target else tile_s_target
    num_s = pl.cdiv(S, tile_s)

    kernel = functools.partial(
        _pos_enc_kernel, p=float(p), training=bool(training),
        seq_len=S, tile_s=tile_s, d=D,
    )

    itemsize = jnp.dtype(x.dtype).itemsize
    cost = pl.CostEstimate(
        flops=B * S * D,                               # one add per element
        transcendentals=0,
        bytes_accessed=(2 * B * S * D + S * D) * itemsize,
    )

    return pl.pallas_call(
        kernel,
        out_shape=jax.ShapeDtypeStruct((B, S, D), x.dtype),
        grid_spec=pltpu.PrefetchScalarGridSpec(
            num_scalar_prefetch=1,                     # seed lands in SMEM
            grid=(num_s, B),                           # seq-tiles outer, batch inner
            in_specs=[
                # x: batch dim squeezed; one (tile_s, D) block per (s, b)
                pl.BlockSpec((None, tile_s, D), lambda s, b, seed: (b, s, 0)),
                # pe: depends only on the OUTER seq-tile index -> stays resident
                # in VMEM across the inner batch loop.
                pl.BlockSpec((tile_s, D), lambda s, b, seed: (s, 0)),
            ],
            out_specs=pl.BlockSpec((None, tile_s, D), lambda s, b, seed: (b, s, 0)),
        ),
        compiler_params=pltpu.CompilerParams(
            # No cross-step carry anywhere -> both axes parallel (v7x 2-TC sharding).
            dimension_semantics=("parallel", "parallel"),
            vmem_limit_bytes=32 * 1024 * 1024,
        ),
        cost_estimate=cost,
    )(seed_arr, x, pe_slice)


# ----------------------------------------------------------------------------
# Demo / smoke test
# ----------------------------------------------------------------------------
if __name__ == "__main__":
    D_MODEL = 512                                      # d_model from the spec (128-multiple)
    B, S = 2, 8
    MAX_LEN = 16
    P = 0.1

    key = jax.random.PRNGKey(0)
    x = jax.random.normal(key, (B, S, D_MODEL), dtype=jnp.float32)
    pe = make_pe_buffer(D_MODEL, MAX_LEN)

    # Eval-mode forward (dropout is identity) -- check against reference.
    out_eval = jax.block_until_ready(
        positional_encoding_forward(x, pe, p=P, training=False)
    )
    ref = np.asarray(x) + np.asarray(pe)[:S][None, :, :]
    np.testing.assert_allclose(np.asarray(out_eval), ref, rtol=1e-6, atol=1e-6)

    # Training-mode forward (dropout active, in-kernel counter-hash RNG).
    out_train = jax.block_until_ready(
        positional_encoding_forward(x, pe, p=P, training=True, seed=123)
    )
    out_np = np.asarray(out_train)
    assert out_np.shape == (B, S, D_MODEL)

    # Every surviving element must equal (x + pe) / (1 - p); dropped ones are 0.
    kept = out_np != 0.0
    np.testing.assert_allclose(out_np[kept], (ref / (1.0 - P))[kept],
                               rtol=1e-5, atol=1e-5)
    drop_frac = 1.0 - kept.mean()
    assert 0.0 <= drop_frac < 0.3, f"unexpected drop fraction {drop_frac}"

    print("KERNEL_OK")
</pallas_src>

<mosaic_0001>
module attributes {stable_mosaic.version = 11 : i64} {
  func.func @_pos_enc_kernel(%arg0: i32, %arg1: i32, %arg2: memref<1xi32, #tpu.memory_space<smem>>, %arg3: memref<1x8x512xf32, #tpu.memory_space<vmem>>, %arg4: memref<8x512xf32, #tpu.memory_space<vmem>>, %arg5: memref<1x8x512xf32, #tpu.memory_space<vmem>>) attributes {dimension_semantics = [#tpu.dimension_semantics<parallel>, #tpu.dimension_semantics<parallel>], iteration_bounds = array<i64: 1, 2>, scalar_prefetch = 1 : i64, scratch_operands = 0 : i64, tpu.core_type = #tpu.core_type<tc>, window_params = [{transform_indices = @transform_0, window_bounds = array<i64: 1, 8, 512>}, {transform_indices = @transform_1, window_bounds = array<i64: 8, 512>}, {transform_indices = @transform_2, window_bounds = array<i64: 1, 8, 512>}]} {
    %c0 = arith.constant 0 : index
    %c0_0 = arith.constant 0 : index
    %c0_1 = arith.constant 0 : index
    %0 = vector.load %arg3[%c0, %c0_0, %c0_1] : memref<1x8x512xf32, #tpu.memory_space<vmem>>, vector<1x8x512xf32>
    %1 = vector.shape_cast %0 : vector<1x8x512xf32> to vector<8x512xf32>
    %c0_2 = arith.constant 0 : index
    %c0_3 = arith.constant 0 : index
    %2 = vector.load %arg4[%c0_2, %c0_3] : memref<8x512xf32, #tpu.memory_space<vmem>>, vector<8x512xf32>
    %3 = arith.addf %1, %2 : vector<8x512xf32>
    %c0_4 = arith.constant 0 : index
    %c0_5 = arith.constant 0 : index
    %c0_6 = arith.constant 0 : index
    %4 = vector.load %arg5[%c0_4, %c0_5, %c0_6] : memref<1x8x512xf32, #tpu.memory_space<vmem>>, vector<1x8x512xf32>
    %5 = vector.shape_cast %4 : vector<1x8x512xf32> to vector<8x512xf32>
    %6 = vector.shape_cast %3 : vector<8x512xf32> to vector<1x8x512xf32>
    tpu.vector_store %arg5[%c0_4, %c0_5, %c0_6], %6 {strides = array<i32>} : memref<1x8x512xf32, #tpu.memory_space<vmem>>, vector<1x8x512xf32>,
    return
  }
  func.func @transform_0(%arg0: i32, %arg1: i32, %arg2: memref<1xi32, #tpu.memory_space<smem>>) -> (i32, i32, i32) {
    %c0_i32 = arith.constant 0 : i32
    %c0_i32_0 = arith.constant 0 : i32
    return %arg1, %arg0, %c0_i32 : i32, i32, i32
  }
  func.func @transform_1(%arg0: i32, %arg1: i32, %arg2: memref<1xi32, #tpu.memory_space<smem>>) -> (i32, i32) {
    %c0_i32 = arith.constant 0 : i32
    %c0_i32_0 = arith.constant 0 : i32
    return %arg0, %c0_i32 : i32, i32
  }
  func.func @transform_2(%arg0: i32, %arg1: i32, %arg2: memref<1xi32, #tpu.memory_space<smem>>) -> (i32, i32, i32) {
    %c0_i32 = arith.constant 0 : i32
    %c0_i32_0 = arith.constant 0 : i32
    return %arg1, %arg0, %c0_i32 : i32, i32, i32
  }
}

</mosaic_0001>

<llo_original>
// kernel: tpu_custom_call.1
$region0: #{tpu_custom_call.1}
  #allocation0 [shape = 'u32[]', space=smem, size = 0x4, offset = 0x4, fixed_abs, tag = 'smem constant byte address 0x4 - core index']
  #allocation1 [shape = 'u32[144,128]{1,0:T(1,128)}', space=vmem, size = 0x12000, scoped, tag = 'internal scratch']
  #allocation2 [shape = 's32[1]{0}', space=sflag, size = 0x4, scoped, tag = 'scoped memory for tpu_custom_call.1']
  #allocation3 [shape = 's32[1]{0:T(128)S(6)}', space=smem, size = 0x200, scoped, tag = 'prefetched SMEM operand 0']
  %s0 = inlined_call_operand.<no memory space> [shape: s32[1], index: 0, kind: input, shape index: {}]
  %s1 = inlined_call_operand.hbm [shape: f32[2,8,512], index: 1, kind: input, shape index: {}]
  %s2 = inlined_call_operand.hbm [shape: f32[8,512], index: 2, kind: input, shape index: {}]
  %s3 = inlined_call_operand.hbm [shape: f32[2,8,512], index: 3, kind: output, shape index: {}]
  %s4 = sld [smem:[#allocation0]]
  $region49: #{tpu_custom_call.1} parent=0
    _
  %s6 = ssub.s32 1, %s4
  %s7 = scalar_select 0, %s6, %s4
  %8 = sst [smem:[#allocation3]] %s0
  $region1: #{tpu_custom_call.1} parent=0
    #allocation4 [shape = 'u8[32768]{0}', space=vmem, size = 0x8000, scoped, tag = 'input window, operand 1']
    #allocation5 [shape = 's32[2]{0}', space=sflag, size = 0x8, scoped, tag = 'scoped memory for tpu_custom_call.1']
    #allocation6 [shape = 's32[2]{0}', space=sflag, size = 0x8, scoped, tag = 'scoped memory for tpu_custom_call.1']
    #allocation7 [shape = 'u8[16384]{0}', space=vmem, size = 0x4000, scoped, tag = 'input window, operand 2, single buffered']
    #allocation8 [shape = 's32[1]{0}', space=sflag, size = 0x4, scoped, tag = 'scoped memory for tpu_custom_call.1']
    #allocation9 [shape = 'u8[32768]{0}', space=vmem, size = 0x8000, scoped, tag = 'output window, operand 0']
    %9 = vsyncpa [#allocation5], 0
    %s10 = scalar_lea.sflag [#allocation5], 1
    %11 = vsyncpa %s10, 0
    %12 = vsyncpa [#allocation8], 0
    %13 = vsyncpa [#allocation6], 0
    %s14 = scalar_lea.sflag [#allocation6], 1
    %15 = vsyncpa %s14, 0
    loop: start=0, step=1, limit=4
    $region2: #{tpu_custom_call.1} parent=1 // loop_pre_header
      _
    $region3: #{tpu_custom_call.1} parent=1 // loop_header
      %s17 = sphi 0, %s21
      %p18 = scmp.ge.s32.totalorder %s17, 4
      %s24 = sphi 0, %s36
      %s25 = sphi 0, %s32
      %s26 = sphi 0, %s24
      %s27 = sphi 0, %s25
      %s28 = sphi 0, %s26
      %s29 = sphi 0, %s27
      %s41 = sphi 0, %s43
      %s44 = sphi 0, %s41
      %s45 = sphi 0, %s44
      %s61 = sphi 0, %s45
      %s67 = sphi 0, %s69
      %s70 = sphi 0, %s67
      %s71 = sphi 0, %s70
      %s87 = sphi 0, %s71
      %s95 = sphi 0, %s97
      %s98 = sphi 0, %s95
      %s99 = sphi 0, %s98
      %s115 = sphi 0, %s99
    $region4: #{tpu_custom_call.1} parent=1 // loop_header_branch
      %20 = sbr.rel (%p18) target = $region8
    $region5: #{tpu_custom_call.1} parent=1 // loop_body
      %s22 = ssub.s32 %s17, 1
      %s23 = ssub.s32 %s17, 2
      %s30 = sadd.s32 1, %s25
      %p31 = scmp.ge.s32.totalorder %s30, 2
      %s32 = scalar_select %p31, 0, %s30
      %s33 = sadd.s32 1, %s24
      %s34 = scalar_select %p31, %s33, %s24
      %p35 = scmp.ge.s32.totalorder %s34, 1
      %s36 = scalar_select %p35, 0, %s34
      %s37 = ssub.s32 %s25, %s32
      %s38 = ssub.s32 %s24, %s36
      %s39 = sor.u32 %s37, %s38
      %p40 = scmp.eq.s32.totalorder %s39, 0
      %s42 = sadd.s32 %s41, 1
      %s43 = scalar_select %p40, %s41, %s42
      %p46 = pneg %p40
      %p47 = scmp.eq.s32.totalorder %s17, 1
      %p48 = por %p46, %p47
      %p49 = scmp.ne.s32.totalorder %s41, %s44
      %p50 = scmp.eq.s32.totalorder %s17, 0
      %p51 = por %p49, %p50
      %p52 = scmp.ne.s32.totalorder %s41, %s44
      %p53 = scmp.eq.s32.totalorder %s22, 1
      %p54 = por %p52, %p53
      %p55 = scmp.ne.s32.totalorder %s44, %s45
      %p56 = scmp.eq.s32.totalorder %s22, 0
      %p57 = por %p55, %p56
      %p58 = scmp.ne.s32.totalorder %s44, %s45
      %p59 = scmp.eq.s32.totalorder %s23, 1
      %p60 = por %p58, %p59
      %p62 = scmp.ne.s32.totalorder %s45, %s61
      %p63 = scmp.eq.s32.totalorder %s23, 0
      %p64 = por %p62, %p63
      %s65 = ssub.s32 %s24, %s36
      %p66 = scmp.eq.s32.totalorder %s65, 0
      %s68 = sadd.s32 %s67, 1
      %s69 = scalar_select %p66, %s67, %s68
      %p72 = pneg %p66
      %p73 = scmp.eq.s32.totalorder %s17, 1
      %p74 = por %p72, %p73
      %p75 = scmp.ne.s32.totalorder %s67, %s70
      %p76 = scmp.eq.s32.totalorder %s17, 0
      %p77 = por %p75, %p76
      %p78 = scmp.ne.s32.totalorder %s67, %s70
      %p79 = scmp.eq.s32.totalorder %s22, 1
      %p80 = por %p78, %p79
      %p81 = scmp.ne.s32.totalorder %s70, %s71
      %p82 = scmp.eq.s32.totalorder %s22, 0
      %p83 = por %p81, %p82
      %p84 = scmp.ne.s32.totalorder %s70, %s71
      %p85 = scmp.eq.s32.totalorder %s23, 1
      %p86 = por %p84, %p85
      %p88 = scmp.ne.s32.totalorder %s71, %s87
      %p89 = scmp.eq.s32.totalorder %s23, 0
      %p90 = por %p88, %p89
      %s91 = ssub.s32 %s25, %s32
      %s92 = ssub.s32 %s24, %s36
      %s93 = sor.u32 %s91, %s92
      %p94 = scmp.eq.s32.totalorder %s93, 0
      %s96 = sadd.s32 %s95, 1
      %s97 = scalar_select %p94, %s95, %s96
      %p100 = pneg %p94
      %p101 = scmp.eq.s32.totalorder %s17, 1
      %p102 = por %p100, %p101
      %p103 = scmp.ne.s32.totalorder %s95, %s98
      %p104 = scmp.eq.s32.totalorder %s17, 0
      %p105 = por %p103, %p104
      %p106 = scmp.ne.s32.totalorder %s95, %s98
      %p107 = scmp.eq.s32.totalorder %s22, 1
      %p108 = por %p106, %p107
      %p109 = scmp.ne.s32.totalorder %s98, %s99
      %p110 = scmp.eq.s32.totalorder %s22, 0
      %p111 = por %p109, %p110
      %p112 = scmp.ne.s32.totalorder %s98, %s99
      %p113 = scmp.eq.s32.totalorder %s23, 1
      %p114 = por %p112, %p113
      %p116 = scmp.ne.s32.totalorder %s99, %s115
      %p117 = scmp.eq.s32.totalorder %s23, 0
      %p118 = por %p116, %p117
      %p119 = scmp.le.s32.totalorder 1, %s17
      %p120 = scmp.lt.s32.totalorder %s17, 3
      %p121 = pnand %p119, %p120
      %p122 = pneg %p121
      // Predicated region
      $region9: #{tpu_custom_call.1} parent=5 // pred_check
        _
      $region10: #{tpu_custom_call.1} parent=5 // pred_check_branch
        %124 = sbr.rel (%p121) target = $region12
      $region11: #{tpu_custom_call.1} parent=5 // pred_region
        %s125 = ssub.s32 %s17, 1
        // Predicated region
        $region13: #{tpu_custom_call.1} parent=11 // pred_check
          %p126 = pneg %p83
        $region14: #{tpu_custom_call.1} parent=11 // pred_check_branch
          %128 = sbr.rel (%p126) target = $region16
        $region15: #{tpu_custom_call.1} parent=11 // pred_region
          %s130 = ssub.s32 512, 512
          %131 = vsyncadd [#allocation8], %s130
          %s132 = smul.addr %s26, 4
          %s133 = smul.addr %s132, 128
          %s134 = scalar_lea.hbm %s2, %s133
          %s136 = sshll.u32 [#allocation7], 4
          %s137 = int_to_ptr.vmem [resolvable:$true] %s136
          %139 = dma.hbm_to_vmem [thread:$0]  %s134, 512, %s137, [#allocation8]
        $region16: #{tpu_custom_call.1} parent=11 // pred_fallthru
          _
      $region12: #{tpu_custom_call.1} parent=5 // pred_fallthru
        _
      %p140 = scmp.lt.s32.totalorder %s17, 2
      // Predicated region
      $region17: #{tpu_custom_call.1} parent=5 // pred_check
        %p141 = pneg %p140
      $region18: #{tpu_custom_call.1} parent=5 // pred_check_branch
        %143 = sbr.rel (%p141) target = $region20
      $region19: #{tpu_custom_call.1} parent=5 // pred_region
        // Predicated region
        $region21: #{tpu_custom_call.1} parent=19 // pred_check
          %p144 = pneg %p51
        $region22: #{tpu_custom_call.1} parent=19 // pred_check_branch
          %146 = sbr.rel (%p144) target = $region24
        $region23: #{tpu_custom_call.1} parent=19 // pred_region
          %s147 = sand.u32 %s41, 1
          %s148 = scalar_lea.sflag [#allocation5], %s147
          %s149 = sand.u32 %s41, 1
          %s150 = smul.addr %s149, 32
          %s151 = scalar_lea.vmem [#allocation4], %s150
          %s153 = ssub.s32 512, 512
          %154 = vsyncadd %s148, %s153
          %s155 = smul.addr %s24, 4
          %s156 = smul.addr %s25, 4
          %s157 = sadd.s32 %s155, %s156
          %s158 = smul.addr %s157, 128
          %s159 = scalar_lea.hbm %s1, %s158
          %s161 = sshll.u32 %s151, 4
          %s162 = int_to_ptr.vmem [resolvable:$true] %s161
          %164 = dma.hbm_to_vmem [thread:$0]  %s159, 512, %s162, %s148
        $region24: #{tpu_custom_call.1} parent=19 // pred_fallthru
          _
      $region20: #{tpu_custom_call.1} parent=5 // pred_fallthru
        _
      %p165 = scmp.le.s32.totalorder 1, %s17
      %p166 = scmp.lt.s32.totalorder %s17, 3
      %p167 = pnand %p165, %p166
      %p168 = pneg %p167
      // Predicated region
      $region25: #{tpu_custom_call.1} parent=5 // pred_check
        _
      $region26: #{tpu_custom_call.1} parent=5 // pred_check_branch
        %170 = sbr.rel (%p167) target = $region28
      $region27: #{tpu_custom_call.1} parent=5 // pred_region
        %s171 = ssub.s32 %s17, 1
        %s172 = sand.u32 %s44, 1
        %s173 = scalar_lea.sflag [#allocation5], %s172
        %s174 = sand.u32 %s44, 1
        %s175 = smul.addr %s174, 32
        %s176 = scalar_lea.vmem [#allocation4], %s175
        // Predicated region
        $region29: #{tpu_custom_call.1} parent=27 // pred_check
          %p177 = pneg %p57
        $region30: #{tpu_custom_call.1} parent=27 // pred_check_branch
          %179 = sbr.rel (%p177) target = $region32
        $region31: #{tpu_custom_call.1} parent=27 // pred_region
          %180 = dma.done %s173, 512
        $region32: #{tpu_custom_call.1} parent=27 // pred_fallthru
          _
        // Predicated region
        $region33: #{tpu_custom_call.1} parent=27 // pred_check
          %p181 = pneg %p83
        $region34: #{tpu_custom_call.1} parent=27 // pred_check_branch
          %183 = sbr.rel (%p181) target = $region36
        $region35: #{tpu_custom_call.1} parent=27 // pred_region
          %184 = dma.done [#allocation8], 512
        $region36: #{tpu_custom_call.1} parent=27 // pred_fallthru
          _
        %s185 = sand.u32 %s44, 1
        %s186 = scalar_lea.sflag [#allocation5], %s185
        %s187 = sand.u32 %s44, 1
        %s188 = smul.addr %s187, 32
        %s189 = scalar_lea.vmem [#allocation4], %s188
        %p190 = pneg %p57
        %p191 = pneg %p54
        %p192 = pneg %p83
        %p193 = pneg %p80
        %p194 = pneg %p111
        %p195 = pneg %p108
        %s196 = sand.u32 %s98, 1
        %s197 = scalar_lea.sflag [#allocation6], %s196
        %s198 = sand.u32 %s98, 1
        %s199 = smul.addr %s198, 32
        %s200 = scalar_lea.vmem [#allocation9], %s199
        %v201 = vld [vmem:[%s176] sm:$0xff]
        %v202 = vld [vmem:[%s176 + $0x8] sm:$0xff]
        %v203 = vld [vmem:[%s176 + $0x10] sm:$0xff]
        %v204 = vld [vmem:[%s176 + $0x18] sm:$0xff]
        %v205 = vld [vmem:[#allocation7] sm:$0xff]
        %v206 = vld [vmem:[#allocation7 + $0x8] sm:$0xff]
        %v207 = vld [vmem:[#allocation7 + $0x10] sm:$0xff]
        %v208 = vld [vmem:[#allocation7 + $0x18] sm:$0xff]
        %v209 = vadd.f32 %v201, %v205
        %v210 = vadd.f32 %v202, %v206
        %v211 = vadd.f32 %v203, %v207
        %v212 = vadd.f32 %v204, %v208
        %213 = vst [vmem:[%s200] sm:$0xff] %v209
        %214 = vst [vmem:[%s200 + $0x8] sm:$0xff] %v210
        %215 = vst [vmem:[%s200 + $0x10] sm:$0xff] %v211
        %216 = vst [vmem:[%s200 + $0x18] sm:$0xff] %v212
        %s217 = sand.u32 %s98, 1
        %s218 = scalar_lea.sflag [#allocation6], %s217
        %s219 = sand.u32 %s98, 1
        %s220 = smul.addr %s219, 32
        %s221 = scalar_lea.vmem [#allocation9], %s220
        // Predicated region
        $region37: #{tpu_custom_call.1} parent=27 // pred_check
          %p222 = pneg %p108
        $region38: #{tpu_custom_call.1} parent=27 // pred_check_branch
          %224 = sbr.rel (%p222) target = $region40
        $region39: #{tpu_custom_call.1} parent=27 // pred_region
          %s226 = ssub.s32 512, 512
          %227 = vsyncadd %s218, %s226
          %s228 = smul.addr %s26, 4
          %s229 = smul.addr %s27, 4
          %s230 = sadd.s32 %s228, %s229
          %s231 = smul.addr %s230, 128
          %s232 = scalar_lea.hbm %s3, %s231
          %s234 = sshll.u32 %s221, 4
          %s235 = int_to_ptr.vmem [resolvable:$true] %s234
          %237 = dma.vmem_to_hbm [thread:$0]  %s235, 512, %s232, %s218
        $region40: #{tpu_custom_call.1} parent=27 // pred_fallthru
          _
      $region28: #{tpu_custom_call.1} parent=5 // pred_fallthru
        _
      %p238 = scmp.le.s32.totalorder 2, %s17
      // Predicated region
      $region41: #{tpu_custom_call.1} parent=5 // pred_check
        %p239 = pneg %p238
      $region42: #{tpu_custom_call.1} parent=5 // pred_check_branch
        %241 = sbr.rel (%p239) target = $region44
      $region43: #{tpu_custom_call.1} parent=5 // pred_region
        %s242 = ssub.s32 %s17, 2
        // Predicated region
        $region45: #{tpu_custom_call.1} parent=43 // pred_check
          %p243 = pneg %p114
        $region46: #{tpu_custom_call.1} parent=43 // pred_check_branch
          %245 = sbr.rel (%p243) target = $region48
        $region47: #{tpu_custom_call.1} parent=43 // pred_region
          %s246 = sand.u32 %s99, 1
          %s247 = scalar_lea.sflag [#allocation6], %s246
          %s248 = sand.u32 %s99, 1
          %s249 = smul.addr %s248, 32
          %s250 = scalar_lea.vmem [#allocation9], %s249
          %251 = dma.done %s247, 512
        $region48: #{tpu_custom_call.1} parent=43 // pred_fallthru
          _
      $region44: #{tpu_custom_call.1} parent=5 // pred_fallthru
        _
    $region6: #{tpu_custom_call.1} parent=1 // loop_footer
      %s21 = sadd.s32 1, %s17
    $region7: #{tpu_custom_call.1} parent=1 // loop_footer_branch
      %16 = sbr.rel target = $region3
    $region8: #{tpu_custom_call.1} parent=1 // loop_exit
      _
    %252 = vsyncpa [#allocation5], 1
    %s253 = scalar_lea.sflag [#allocation5], 1
    %254 = vsyncpa %s253, 1
    %255 = vsyncpa [#allocation8], 1
    %256 = vsyncpa [#allocation6], 1
    %s257 = scalar_lea.sflag [#allocation6], 1
    %258 = vsyncpa %s257, 1

</llo_original>
